<compile_context>
chip_gen: v7x
topology: tpu7x:2x2x1
jax: 0.10.0
libtpu: 0.0.40
codegen_flags: <defaults>
</compile_context>

<pallas_src>
from functools import partial
from math import sqrt

import jax
import jax.numpy as jnp
from jax.experimental import pallas as pl
from jax.experimental.pallas import tpu as pltpu

EPS = 1e-05
LANES = 128
BLK_ROWS = 4096   # (4096, 128) f32 = 2 MiB per output buffer per block


def adversary_kernel(p_ref, x_ref, o_ref):
    # Folded scalar parameters (SMEM, read once per grid step — negligible).
    a      = p_ref[0]   # 1 + |c|
    w_sum  = p_ref[1]   # w0 + w2
    w_diff = p_ref[2]   # w1 - w2
    bias   = p_ref[3]   # linear bias

    y_hat = x_ref[0]    # (blk, 128) f32, lane-dense
    y     = x_ref[1]    # (blk, 128) f32

    # log_r = log((y_hat + eps) / (1 + eps - y_hat)); the divide is a single
    # approx EUP reciprocal (v7x: trims the binding EUP chain; v5e/v6e: kernel is
    # HBM-bound, neutral). Its relative error is amplified by a = 1+|c| through
    # the sigmoid argument — negligible at the validated tolerances.
    log_r = jnp.log((y_hat + EPS) * pl.reciprocal(1.0 + EPS - y_hat, approx=True))

    # s = sigmoid(a * log_r) in the numerically stable form: no exp-overflow ->
    # NaN path for y_hat near 0 or 1 (matches the reference's saturating sigmoid).
    s = pl.reciprocal(1.0 + jnp.exp(-a * log_r), approx=True)

    # Folded Linear(3,1) over hstack((s, s*y, s*(1-y))):
    #   s*w0 + (s*y)*w1 + (s*(1-y))*w2 + b == s*(w0+w2 + y*(w1-w2)) + b
    lin = s * (w_sum + y * w_diff) + bias

    # Final sigmoid with an EXACT reciprocal: approximation error stays off the
    # returned probability (EUP/VPU have slack in this memory-bound op).
    o_ref[...] = pl.reciprocal(1.0 + jnp.exp(-lin), approx=False)


def _choose_block(rows: int, blk_rows: int) -> int:
    """Large blocks amortize the ~0.35us/step overhead; guarantee >=2 grid steps
    whenever rows allow (megacore / v7x 2-TC sharding); multiple of 8 when tiled."""
    if rows < 16:
        return max(rows, 1)                        # single tiny block == full extent
    if rows < 2 * blk_rows:
        return 8 * pl.cdiv(pl.cdiv(rows, 2), 8)    # exactly 2 blocks
    return blk_rows


@partial(jax.jit, static_argnames=("blk_rows",))
def adversary_forward(x, c, w, b, blk_rows=BLK_ROWS):
    """x: (N, 2) (col 0 = y_hat, col 1 = y); c: (1,), w: (3,), b: (1,) -> (N, 1) f32."""
    n = x.shape[0]
    rows = pl.cdiv(n, LANES)
    blk = _choose_block(rows, blk_rows)
    rows_padded = blk * pl.cdiv(rows, blk)
    pad = rows_padded * LANES - n

    # ONE fused XLA pass: transpose + pad + reshape -> (2, rows_padded, 128) slab.
    xp = jnp.pad(x.astype(jnp.float32).T, ((0, 0), (0, pad)))
    xp = xp.reshape(2, rows_padded, LANES)

    # Fold all scalar-parameter math once in the wrapper (never per block).
    params = jnp.stack(
        [1.0 + jnp.abs(c[0]), w[0] + w[2], w[1] - w[2], b[0]]
    ).astype(jnp.float32)

    out = pl.pallas_call(
        adversary_kernel,
        out_shape=jax.ShapeDtypeStruct((rows_padded, LANES), jnp.float32),
        grid_spec=pltpu.PrefetchScalarGridSpec(
            num_scalar_prefetch=0,
            grid=(rows_padded // blk,),
            in_specs=[
                pl.BlockSpec(memory_space=pltpu.MemorySpace.SMEM),   # folded scalars (4,)
                pl.BlockSpec((2, blk, LANES), lambda i: (0, i, 0)),  # y_hat & y slabs
            ],
            out_specs=pl.BlockSpec((blk, LANES), lambda i: (i, 0)),
        ),
        compiler_params=pltpu.CompilerParams(
            dimension_semantics=("parallel",),
        ),
    )(params, xp)

    # Trim padded lanes; stays inside this jit so no extra eager HBM round-trip.
    return out.reshape(-1)[:n].reshape(n, 1)


def reference_forward(x, c, w, b):
    """Pure-JAX reference mirroring the PyTorch module exactly."""
    y_hat = x[:, 0]
    y = x[:, 1]
    sig_inv_y_hat = jnp.log((y_hat + EPS) / (1.0 + EPS - y_hat))
    c_plus_1 = 1.0 + jnp.abs(c)                        # (1,)
    s = jax.nn.sigmoid(c_plus_1 * sig_inv_y_hat)       # (N,)
    s = s.reshape(-1, 1)
    y = y.reshape(-1, 1)
    concat = jnp.hstack((s, s * y, s * (1.0 - y)))     # (N, 3)
    z_hat = jax.nn.sigmoid(concat @ w.reshape(3, 1) + b)
    return z_hat


if __name__ == "__main__":
    key = jax.random.PRNGKey(0)
    k_yhat, k_y, k_w, k_b = jax.random.split(key, 4)

    # Deterministic parameter init (shapes from __init__):
    # c = ones(1); Linear(3,1): weight (1,3) ~ U(-1/sqrt(3), 1/sqrt(3)), bias (1,).
    c = jnp.ones((1,), jnp.float32)
    bound = 1.0 / sqrt(3.0)
    w = jax.random.uniform(k_w, (3,), jnp.float32, minval=-bound, maxval=bound)
    b = jax.random.uniform(k_b, (1,), jnp.float32, minval=-bound, maxval=bound)

    # N=8: tiny single-block; N=1000: pad/trim path; N=4096: multi-block grid
    # (2 steps -> exercises the "parallel" axis / megacore sharding).
    for N in (8, 1000, 4096):
        kh = jax.random.fold_in(k_yhat, N)
        ky = jax.random.fold_in(k_y, N)
        y_hat = jax.random.uniform(kh, (N,), jnp.float32, minval=0.0, maxval=1.0)
        # Include the endpoints: exercises the numerically-stable sigmoid path.
        y_hat = y_hat.at[0].set(0.0).at[1].set(1.0)
        y = jax.random.bernoulli(ky, 0.5, (N,)).astype(jnp.float32)
        x = jnp.stack([y_hat, y], axis=1)              # (N, 2)

        out = jax.block_until_ready(adversary_forward(x, c, w, b))
        ref = reference_forward(x, c, w, b)
        assert out.shape == (N, 1)
        assert bool(jnp.all(jnp.isfinite(out)))
        # Tolerance covers the two approx (EUP) reciprocals feeding s; the final
        # sigmoid reciprocal is exact, so the returned probabilities track the
        # reference much tighter in practice.
        assert jnp.allclose(out, ref, atol=1e-2, rtol=1e-2), (N, out, ref)

    print("KERNEL_OK")
</pallas_src>

<mosaic_0001>
module attributes {stable_mosaic.version = 11 : i64} {
  func.func @adversary_kernel(%arg0: i32, %arg1: memref<4xf32, #tpu.memory_space<smem>>, %arg2: memref<2x1x128xf32, #tpu.memory_space<vmem>>, %arg3: memref<1x128xf32, #tpu.memory_space<vmem>>) attributes {dimension_semantics = [#tpu.dimension_semantics<parallel>], iteration_bounds = array<i64: 1>, scalar_prefetch = 0 : i64, scratch_operands = 0 : i64, tpu.core_type = #tpu.core_type<tc>, window_params = [{transform_indices = @transform_0, window_bounds = array<i64: 4>}, {transform_indices = @transform_1, window_bounds = array<i64: 2, 1, 128>}, {transform_indices = @transform_2, window_bounds = array<i64: 1, 128>}]} {
    %c0 = arith.constant 0 : index
    %0 = memref.load %arg1[%c0] : memref<4xf32, #tpu.memory_space<smem>>
    %c1 = arith.constant 1 : index
    %1 = memref.load %arg1[%c1] : memref<4xf32, #tpu.memory_space<smem>>
    %c2 = arith.constant 2 : index
    %2 = memref.load %arg1[%c2] : memref<4xf32, #tpu.memory_space<smem>>
    %c3 = arith.constant 3 : index
    %3 = memref.load %arg1[%c3] : memref<4xf32, #tpu.memory_space<smem>>
    %c0_0 = arith.constant 0 : index
    %c0_1 = arith.constant 0 : index
    %c0_2 = arith.constant 0 : index
    %4 = vector.load %arg2[%c0_0, %c0_1, %c0_2] : memref<2x1x128xf32, #tpu.memory_space<vmem>>, vector<1x1x128xf32>
    %5 = vector.shape_cast %4 : vector<1x1x128xf32> to vector<1x128xf32>
    %c1_3 = arith.constant 1 : index
    %c0_4 = arith.constant 0 : index
    %c0_5 = arith.constant 0 : index
    %6 = vector.load %arg2[%c1_3, %c0_4, %c0_5] : memref<2x1x128xf32, #tpu.memory_space<vmem>>, vector<1x1x128xf32>
    %7 = vector.shape_cast %6 : vector<1x1x128xf32> to vector<1x128xf32>
    %cst = arith.constant 9.99999974E-6 : f32
    %8 = vector.broadcast %cst : f32 to vector<1x128xf32>
    %9 = arith.addf %5, %8 : vector<1x128xf32>
    %cst_6 = arith.constant 1.000010e+00 : f32
    %10 = vector.broadcast %cst_6 : f32 to vector<1x128xf32>
    %11 = arith.subf %10, %5 : vector<1x128xf32>
    %12 = tpu.reciprocal %11 {approx = true} : vector<1x128xf32> -> vector<1x128xf32>
    %13 = arith.mulf %9, %12 : vector<1x128xf32>
    %14 = math.log %13 : vector<1x128xf32>
    %cst_7 = arith.constant 0.000000e+00 : f32
    %15 = arith.subf %cst_7, %0 : f32
    %16 = vector.broadcast %15 : f32 to vector<1x128xf32>
    %17 = arith.mulf %16, %14 : vector<1x128xf32>
    %18 = math.exp %17 : vector<1x128xf32>
    %cst_8 = arith.constant 1.000000e+00 : f32
    %19 = vector.broadcast %cst_8 : f32 to vector<1x128xf32>
    %20 = arith.addf %19, %18 : vector<1x128xf32>
    %21 = tpu.reciprocal %20 {approx = true} : vector<1x128xf32> -> vector<1x128xf32>
    %22 = vector.broadcast %2 : f32 to vector<1x128xf32>
    %23 = arith.mulf %7, %22 : vector<1x128xf32>
    %24 = vector.broadcast %1 : f32 to vector<1x128xf32>
    %25 = arith.addf %24, %23 : vector<1x128xf32>
    %26 = arith.mulf %21, %25 : vector<1x128xf32>
    %27 = vector.broadcast %3 : f32 to vector<1x128xf32>
    %28 = arith.addf %26, %27 : vector<1x128xf32>
    %cst_9 = arith.constant 0.000000e+00 : f32
    %29 = vector.broadcast %cst_9 : f32 to vector<1x128xf32>
    %30 = arith.subf %29, %28 : vector<1x128xf32>
    %31 = math.exp %30 : vector<1x128xf32>
    %cst_10 = arith.constant 1.000000e+00 : f32
    %32 = vector.broadcast %cst_10 : f32 to vector<1x128xf32>
    %33 = arith.addf %32, %31 : vector<1x128xf32>
    %34 = tpu.reciprocal %33 : vector<1x128xf32> -> vector<1x128xf32>
    %c0_11 = arith.constant 0 : index
    %c0_12 = arith.constant 0 : index
    %35 = vector.load %arg3[%c0_11, %c0_12] : memref<1x128xf32, #tpu.memory_space<vmem>>, vector<1x128xf32>
    tpu.vector_store %arg3[%c0_11, %c0_12], %34 {strides = array<i32>} : memref<1x128xf32, #tpu.memory_space<vmem>>, vector<1x128xf32>,
    return
  }
  func.func @transform_0(%arg0: i32) -> i32 {
    %c0_i32 = arith.constant 0 : i32
    %c0_i32_0 = arith.constant 0 : i32
    return %c0_i32 : i32
  }
  func.func @transform_1(%arg0: i32) -> (i32, i32, i32) {
    %c0_i32 = arith.constant 0 : i32
    %c0_i32_0 = arith.constant 0 : i32
    %c0_i32_1 = arith.constant 0 : i32
    return %c0_i32, %arg0, %c0_i32_0 : i32, i32, i32
  }
  func.func @transform_2(%arg0: i32) -> (i32, i32) {
    %c0_i32 = arith.constant 0 : i32
    %c0_i32_0 = arith.constant 0 : i32
    return %arg0, %c0_i32 : i32, i32
  }
}

</mosaic_0001>

<llo_original>
// kernel: adversary_forward.1
$region0: #{adversary_forward.1}
  #allocation0 [shape = 'u32[]', space=smem, size = 0x4, offset = 0x4, fixed_abs, tag = 'smem constant byte address 0x4 - core index']
  #allocation1 [shape = 'u32[144,128]{1,0:T(1,128)}', space=vmem, size = 0x12000, scoped, tag = 'internal scratch']
  %s0 = inlined_call_operand.vmem [shape: f32[4], index: 0, kind: input, shape index: {}]
  %s1 = inlined_call_operand.vmem [shape: f32[2,1,128], index: 1, kind: input, shape index: {}]
  %s2 = inlined_call_operand.vmem [shape: f32[1,128], index: 2, kind: output, shape index: {}]
  %s3 = sld [smem:[#allocation0]]
  $region22: #{adversary_forward.1} parent=0
    _
  %s5 = ssub.s32 1, %s3
  %s6 = scalar_select 0, %s5, %s3
  $region1: #{adversary_forward.1} parent=0
    #allocation2 [shape = 'u8[512]{0}', space=smem, size = 0x200, scoped, tag = 'input window, operand 0, single buffered']
    #allocation3 [shape = 's32[1]{0}', space=sflag, size = 0x4, scoped, tag = 'scoped memory for adversary_forward.1']
    %7 = vsyncpa [#allocation3], 0
    // Predicated region
    $region2: #{adversary_forward.1} parent=1 // pred_check
      _
    $region3: #{adversary_forward.1} parent=1 // pred_check_branch
      %9 = sbr.rel (0) target = $region5
    $region4: #{adversary_forward.1} parent=1 // pred_region
      %s11 = ssub.s32 16, 16
      %12 = vsyncadd [#allocation3], %s11
      %s14 = sshll.u32 %s0, 4
      %s15 = int_to_ptr.vmem [resolvable:$true] %s14
      %17 = dma.vmem_to_smem %s15, 16, [#allocation2], [#allocation3]
    $region5: #{adversary_forward.1} parent=1 // pred_fallthru
      _
    // Predicated region
    $region6: #{adversary_forward.1} parent=1 // pred_check
      _
    $region7: #{adversary_forward.1} parent=1 // pred_check_branch
      %19 = sbr.rel (0) target = $region9
    $region8: #{adversary_forward.1} parent=1 // pred_region
      _
    $region9: #{adversary_forward.1} parent=1 // pred_fallthru
      _
    // Predicated region
    $region10: #{adversary_forward.1} parent=1 // pred_check
      _
    $region11: #{adversary_forward.1} parent=1 // pred_check_branch
      %21 = sbr.rel (0) target = $region13
    $region12: #{adversary_forward.1} parent=1 // pred_region
      %22 = dma.done [#allocation3], 16
    $region13: #{adversary_forward.1} parent=1 // pred_fallthru
      _
    %23 = sfence
    %s24 = sld [smem:[#allocation2]]
    %s25 = sld [smem:[#allocation2 + $0x1]]
    %s26 = sld [smem:[#allocation2 + $0x2]]
    %s27 = sld [smem:[#allocation2 + $0x3]]
    %v28 = vld [vmem:[%s1] sm:$0x1]
    %s29 = scalar_lea.vmem %s1, 1
    %v30 = vld [vmem:[%s29] sm:$0x1]
    %v31 = vadd.f32 %v28, 1e-05
    %v32 = vsub.f32 1.00001, %v28
    %v33 = vrcp.pop %v32
    %v34 = vmul.f32 %v31, %v33
    %v35 = vlog2.pop %v34
    %v36 = vmul.f32 %v35, 0.6931472
    %s37 = ssub.f32 0.0, %s24
    %v38 = vstv %s37
    %v39 = vmul.f32 %v38, %v36
    %v40 = vmul.f32 %v39, 1.442695
    %v41 = vpow.pop %v40
    %v42 = vadd.f32 %v41, 1.0
    %v43 = vrcp.pop %v42
    %v44 = vstv %s26
    %v45 = vmul.f32 %v30, %v44
    %v46 = vstv %s25
    %v47 = vadd.f32 %v46, %v45
    %v48 = vmul.f32 %v43, %v47
    %v49 = vstv %s27
    %v50 = vadd.f32 %v48, %v49
    %v51 = vsub.f32 0.0, %v50
    %v52 = vmul.f32 %v51, 1.442695
    %v53 = vpow.pop %v52
    %v54 = vadd.f32 %v53, 1.0
    %v55 = vrcp.pop %v54
    %56 = vst [vmem:[%s2] sm:$0x1] %v55
    // Predicated region
    $region14: #{adversary_forward.1} parent=1 // pred_check
      _
    $region15: #{adversary_forward.1} parent=1 // pred_check_branch
      %58 = sbr.rel (0) target = $region17
    $region16: #{adversary_forward.1} parent=1 // pred_region
      _
    $region17: #{adversary_forward.1} parent=1 // pred_fallthru
      _
    // Predicated region
    $region18: #{adversary_forward.1} parent=1 // pred_check
      _
    $region19: #{adversary_forward.1} parent=1 // pred_check_branch
      %60 = sbr.rel (0) target = $region21
    $region20: #{adversary_forward.1} parent=1 // pred_region
      _
    $region21: #{adversary_forward.1} parent=1 // pred_fallthru
      _
    %61 = vsyncpa [#allocation3], 1

</llo_original>
